<compile_context>
chip_gen: v7x
topology: tpu7x:2x2x1
jax: 0.10.0
libtpu: 0.0.40
codegen_flags: <defaults>
</compile_context>

<pallas_src>
import functools

import jax
import jax.numpy as jnp
from jax.experimental import pallas as pl
from jax.experimental.pallas import tpu as pltpu


def _round_up(x, m):
    return (x + m - 1) // m * m


def _conv_stats_kernel(xt_ref, w_ref, stats_ref, *, TL, L_out):
    """Phase 1: per-(n, lo, channel) partial sum / sum-of-squares of the conv output.

    xt_ref    : (1, K*C_in, TL) bf16   pre-shifted im2col tile
    w_ref     : (TC, K*C_in)    bf16   weight tile (tap-major columns)
    stats_ref : (1, 1, 2, TC)   f32    accumulated across the innermost grid axis
    """
    lo = pl.program_id(2)
    li = pl.program_id(3)
    n_li = pl.num_programs(3)

    @pl.when(li == 0)
    def _():
        stats_ref[...] = jnp.zeros_like(stats_ref)

    # One MXU matmul per tile: (TC, K*C_in) @ (K*C_in, TL) -> f32 in vregs.
    y = jnp.dot(w_ref[...], xt_ref[0], preferred_element_type=jnp.float32)  # (TC, TL)

    # Mask columns beyond the true L_out so tile padding never enters BN statistics.
    lt = lo * n_li + li
    col = lt * TL + jax.lax.broadcasted_iota(jnp.int32, (1, TL), 1)
    ym = jnp.where(col < L_out, y, 0.0)                                     # (TC, TL)

    # Lane-friendly partials: (2, TC) with C_out in lanes (stack on the leading axis).
    s = jnp.sum(ym, axis=1)            # (TC,)
    ss = jnp.sum(ym * y, axis=1)       # (TC,)  masked y^2
    part = jnp.stack([s, ss], axis=0)  # (2, TC)
    stats_ref[...] = stats_ref[...] + part[None, None]


def _conv_bn_relu_kernel(xt_ref, w_ref, scale_ref, shift_ref, o_ref):
    """Phase 2: conv tile -> y*scale + shift -> ReLU, lane-dense store."""
    y = jnp.dot(w_ref[...], xt_ref[0], preferred_element_type=jnp.float32)  # (TC, TL)
    o_ref[0] = jnp.maximum(y * scale_ref[...] + shift_ref[...], 0.0).astype(o_ref.dtype)


def tcn_block(x, weight, bias, gamma, beta, *, dilation, eps=1e-5):
    """Forward of TCNBlock.

    x: (N, C_in, L) f32; weight: (C_out, C_in, K); bias/gamma/beta: (C_out,).
    Returns (N, C_out, L_out), L_out = L + (K-1)*dilation.

    `bias` is accepted for API parity but not applied: with training-mode BatchNorm
    immediately after the conv it cancels exactly in (y - mean).
    """
    del bias
    N, C_in, L = x.shape
    C_out, _, K = weight.shape
    pad = (K - 1) * dilation
    L_out = L + (K - 1) * dilation
    KC = K * C_in
    out_dt = x.dtype
    out_itemsize = jnp.dtype(out_dt).itemsize

    # ---- C_out tiling: keep the f32 (TC, TL) tile within the vreg file. -----------------
    if C_out > 256 and C_out % 256 == 0:
        TC = 256
    elif C_out > 256 and C_out % 128 == 0:
        TC = 128
    else:
        TC = C_out
    n_ct = C_out // TC

    # ---- Generation-aware VMEM budget (v7x 64 MiB physical, v5e/v6e 128 MiB). -----------
    try:
        vmem_cap = int(pltpu.get_tpu_info().vmem_capacity_bytes)
    except Exception:
        vmem_cap = 64 << 20  # conservative (v7x-safe) fallback
    budget = int(vmem_cap * 0.70)

    def _est_vmem(tl):
        xt_blk = KC * tl * 2                    # bf16 im2col tile, double-buffered
        w_blk = TC * KC * 2                     # bf16 weight tile
        out_blk = TC * tl * out_itemsize        # output tile, double-buffered
        y32 = TC * tl * 4                       # f32 compute temporaries
        return 2 * xt_blk + 2 * w_blk + 2 * out_blk + 3 * y32 + (2 << 20)

    # ---- Lane-dense L tiling, decoupled from L_out divisibility. -------------------------
    tl_cap = 1024 if vmem_cap >= (96 << 20) else 512
    cands = [t for t in (1024, 512, 256, 128) if t <= tl_cap]
    TL = next((t for t in cands if _est_vmem(t) <= budget), 128)
    TL = min(TL, _round_up(L_out, 128))
    L_out_pad = _round_up(L_out, TL)
    n_lt = L_out_pad // TL
    vmem_limit = int(min(budget, max(16 << 20, 2 * _est_vmem(TL))))

    # ---- HBM-side im2col: pre-shift the K dilated taps once (one XLA pad+cast+concat). ---
    # Tap j of xtaps is xpad[..., j*dilation : j*dilation + L_out_pad]; zero right-padding
    # reproduces the conv's own right halo, extra tail columns are masked / sliced off.
    xpad = jnp.pad(x, ((0, 0), (0, 0), (pad, L_out_pad - L))).astype(jnp.bfloat16)
    xtaps = jnp.concatenate(
        [xpad[:, :, j * dilation: j * dilation + L_out_pad] for j in range(K)],
        axis=1)                                                   # (N, K*C_in, L_out_pad)
    # (C_out, K*C_in) tap-major columns, matching the xtaps row order.
    w2d = jnp.transpose(weight, (0, 2, 1)).reshape(C_out, KC).astype(jnp.bfloat16)

    # ---- Phase 1: conv + fused per-channel partial sum / sum-of-squares ------------------
    # Split the L-tile axis into (parallel outer, arbitrary inner) so both v7x TensorCores
    # stay busy even for tiny N; only the accumulation axis is "arbitrary".
    n_lo = 2 if (N * n_ct < 2 and n_lt % 2 == 0) else 1
    n_li = n_lt // n_lo

    stats = pl.pallas_call(
        functools.partial(_conv_stats_kernel, TL=TL, L_out=L_out),
        out_shape=jax.ShapeDtypeStruct((N, n_lo, 2, C_out), jnp.float32),
        grid_spec=pltpu.PrefetchScalarGridSpec(
            num_scalar_prefetch=0,
            grid=(N, n_ct, n_lo, n_li),
            in_specs=[
                pl.BlockSpec((1, KC, TL),
                             lambda n, c, lo, li: (n, 0, lo * n_li + li)),
                pl.BlockSpec((TC, KC), lambda n, c, lo, li: (c, 0)),
            ],
            out_specs=pl.BlockSpec((1, 1, 2, TC),
                                   lambda n, c, lo, li: (n, lo, 0, c)),
        ),
        compiler_params=pltpu.CompilerParams(
            dimension_semantics=("parallel", "parallel", "parallel", "arbitrary"),
            vmem_limit_bytes=vmem_limit),
    )(xtaps, w2d)

    # Tiny global reduction + BN coefficient folding in plain XLA (all f32).
    # (E[y^2]-mean^2 in f32 is adequate at the stated tolerance; a compensated/offset sum
    #  would be the next step if tighter accuracy were ever required.)
    cnt = float(N * L_out)
    tot = jnp.sum(stats, axis=(0, 1))                         # (2, C_out)
    mean = tot[0] / cnt
    var = jnp.maximum(tot[1] / cnt - mean * mean, 0.0)        # biased variance (BN forward)
    inv = jax.lax.rsqrt(var + eps)
    g = gamma.astype(jnp.float32)
    scale = (g * inv).reshape(C_out, 1)
    shift = (beta.astype(jnp.float32) - mean * g * inv).reshape(C_out, 1)

    # ---- Phase 2: conv + normalize + affine + ReLU (recompute; no f32 intermediate) ------
    y = pl.pallas_call(
        _conv_bn_relu_kernel,
        out_shape=jax.ShapeDtypeStruct((N, C_out, L_out_pad), out_dt),
        grid_spec=pltpu.PrefetchScalarGridSpec(
            num_scalar_prefetch=0,
            grid=(N, n_ct, n_lt),
            in_specs=[
                pl.BlockSpec((1, KC, TL), lambda n, c, lt: (n, 0, lt)),
                pl.BlockSpec((TC, KC), lambda n, c, lt: (c, 0)),
                pl.BlockSpec((TC, 1), lambda n, c, lt: (c, 0)),
                pl.BlockSpec((TC, 1), lambda n, c, lt: (c, 0)),
            ],
            out_specs=pl.BlockSpec((1, TC, TL), lambda n, c, lt: (n, c, lt)),
        ),
        compiler_params=pltpu.CompilerParams(
            dimension_semantics=("parallel", "parallel", "parallel"),
            vmem_limit_bytes=vmem_limit),
    )(xtaps, w2d, scale, shift)

    return y[:, :, :L_out]


def _reference(x, weight, bias, gamma, beta, *, dilation, eps=1e-5):
    """Pure-JAX f32 reference with PyTorch TCNBlock forward semantics."""
    N, C_in, L = x.shape
    C_out, _, K = weight.shape
    pad = (K - 1) * dilation
    L_out = L + (K - 1) * dilation
    xpad = jnp.pad(x, ((0, 0), (0, 0), (pad, pad)))
    y = jnp.zeros((N, C_out, L_out), jnp.float32)
    for j in range(K):
        xs = xpad[:, :, j * dilation: j * dilation + L_out]       # (N, C_in, L_out)
        y = y + jnp.einsum('oc,ncl->nol', weight[:, :, j], xs)
    y = y + bias[None, :, None]
    mean = jnp.mean(y, axis=(0, 2), keepdims=True)
    var = jnp.mean((y - mean) ** 2, axis=(0, 2), keepdims=True)
    y = (y - mean) * jax.lax.rsqrt(var + eps)
    y = y * gamma[None, :, None] + beta[None, :, None]
    return jnp.maximum(y, 0.0)


if __name__ == "__main__":
    # TCNBlock(in_channels=4, out_channels=8, kernel_size=3, dilation=2) on x (2, 4, 16).
    N, C_in, C_out, L, K, DIL = 2, 4, 8, 16, 3, 2

    key = jax.random.PRNGKey(0)
    kx, kw, kb, kg, kbe = jax.random.split(key, 5)

    x = jax.random.normal(kx, (N, C_in, L), dtype=jnp.float32)

    bound = 1.0 / (C_in * K) ** 0.5
    weight = jax.random.uniform(kw, (C_out, C_in, K), jnp.float32, -bound, bound)
    bias = jax.random.uniform(kb, (C_out,), jnp.float32, -bound, bound)
    gamma = jax.random.uniform(kg, (C_out,), jnp.float32, 0.5, 1.5)
    beta = 0.1 * jax.random.normal(kbe, (C_out,), dtype=jnp.float32)

    out = jax.block_until_ready(
        tcn_block(x, weight, bias, gamma, beta, dilation=DIL))
    ref = jax.block_until_ready(
        _reference(x, weight, bias, gamma, beta, dilation=DIL))

    assert out.shape == (N, C_out, L + (K - 1) * DIL), out.shape
    assert bool(jnp.all(jnp.isfinite(out)))
    # bf16 MXU operands vs f32 reference -> relaxed tolerance.
    assert bool(jnp.allclose(out, ref, rtol=2e-2, atol=2e-2)), float(
        jnp.max(jnp.abs(out - ref)))

    print("KERNEL_OK")
</pallas_src>

<mosaic_0001>
module attributes {stable_mosaic.version = 11 : i64} {
  func.func @_conv_stats_kernel(%arg0: i32, %arg1: i32, %arg2: i32, %arg3: i32, %arg4: memref<1x12x128xbf16, #tpu.memory_space<vmem>>, %arg5: memref<8x12xbf16, #tpu.memory_space<vmem>>, %arg6: memref<1x1x2x8xf32, #tpu.memory_space<vmem>>) attributes {dimension_semantics = [#tpu.dimension_semantics<parallel>, #tpu.dimension_semantics<parallel>, #tpu.dimension_semantics<parallel>, #tpu.dimension_semantics<arbitrary>], iteration_bounds = array<i64: 2, 1, 1, 1>, scalar_prefetch = 0 : i64, scratch_operands = 0 : i64, tpu.core_type = #tpu.core_type<tc>, window_params = [{transform_indices = @transform_0, window_bounds = array<i64: 1, 12, 128>}, {transform_indices = @transform_1, window_bounds = array<i64: 8, 12>}, {transform_indices = @transform_2, window_bounds = array<i64: 1, 1, 2, 8>}]} {
    %c0_i32 = arith.constant 0 : i32
    %0 = arith.cmpi eq, %arg3, %c0_i32 : i32
    %1 = arith.extui %0 : i1 to i32
    %c0_i32_0 = arith.constant 0 : i32
    %2 = arith.cmpi ne, %1, %c0_i32_0 : i32
    scf.if %2 {
      %cst_16 = arith.constant 0.000000e+00 : f32
      %29 = vector.broadcast %cst_16 : f32 to vector<1x1x2x8xf32>
      %c0_17 = arith.constant 0 : index
      %c0_18 = arith.constant 0 : index
      %c0_19 = arith.constant 0 : index
      %c0_20 = arith.constant 0 : index
      %30 = vector.load %arg6[%c0_17, %c0_18, %c0_19, %c0_20] : memref<1x1x2x8xf32, #tpu.memory_space<vmem>>, vector<1x1x2x8xf32>
      tpu.vector_store %arg6[%c0_17, %c0_18, %c0_19, %c0_20], %29 {strides = array<i32>} : memref<1x1x2x8xf32, #tpu.memory_space<vmem>>, vector<1x1x2x8xf32>,
    } else {
    }
    %c0 = arith.constant 0 : index
    %c0_1 = arith.constant 0 : index
    %3 = vector.load %arg5[%c0, %c0_1] : memref<8x12xbf16, #tpu.memory_space<vmem>>, vector<8x12xbf16>
    %c0_2 = arith.constant 0 : index
    %c0_3 = arith.constant 0 : index
    %c0_4 = arith.constant 0 : index
    %4 = vector.load %arg4[%c0_2, %c0_3, %c0_4] : memref<1x12x128xbf16, #tpu.memory_space<vmem>>, vector<1x12x128xbf16>
    %5 = vector.shape_cast %4 : vector<1x12x128xbf16> to vector<12x128xbf16>
    %cst = arith.constant dense<0.000000e+00> : vector<8x128xf32>
    %6 = tpu.matmul %3, %5, %cst {dimension_numbers = #tpu.dot_dimension_numbers<[1], [0], [0], [1], [0, 0, 1, 1], [], []>} : vector<8x12xbf16>, vector<12x128xbf16>, vector<8x128xf32> -> vector<8x128xf32>
    %c1_i32 = arith.constant 1 : i32
    %7 = arith.muli %arg2, %c1_i32 : i32
    %8 = arith.addi %7, %arg3 : i32
    %c128_i32 = arith.constant 128 : i32
    %9 = arith.muli %8, %c128_i32 : i32
    %10 = tpu.iota {dimensions = array<i32: 1>} : vector<1x128xi32>
    %11 = vector.broadcast %9 : i32 to vector<1x128xi32>
    %12 = arith.addi %11, %10 : vector<1x128xi32>
    %c20_i32 = arith.constant 20 : i32
    %13 = vector.broadcast %c20_i32 : i32 to vector<1x128xi32>
    %14 = arith.cmpi slt, %12, %13 : vector<1x128xi32>
    %cst_5 = arith.constant 0.000000e+00 : f32
    %15 = vector.shape_cast %14 : vector<1x128xi1> to vector<1x128xi1>
    %16 = vector.broadcast %15 : vector<1x128xi1> to vector<8x128xi1>
    %17 = vector.broadcast %cst_5 : f32 to vector<8x128xf32>
    %18 = arith.select %16, %6, %17 : vector<8x128xi1>, vector<8x128xf32>
    %cst_6 = arith.constant dense<0.000000e+00> : vector<8xf32>
    %19 = vector.multi_reduction <add>, %18, %cst_6 [1] : vector<8x128xf32> to vector<8xf32>
    %20 = arith.mulf %18, %6 : vector<8x128xf32>
    %cst_7 = arith.constant dense<0.000000e+00> : vector<8xf32>
    %21 = vector.multi_reduction <add>, %20, %cst_7 [1] : vector<8x128xf32> to vector<8xf32>
    %22 = vector.shape_cast %19 : vector<8xf32> to vector<1x8xf32>
    %23 = vector.shape_cast %21 : vector<8xf32> to vector<1x8xf32>
    %24 = tpu.concatenate %22, %23 in 0 : vector<1x8xf32>, vector<1x8xf32> -> vector<2x8xf32>
    %c0_8 = arith.constant 0 : index
    %c0_9 = arith.constant 0 : index
    %c0_10 = arith.constant 0 : index
    %c0_11 = arith.constant 0 : index
    %25 = vector.load %arg6[%c0_8, %c0_9, %c0_10, %c0_11] : memref<1x1x2x8xf32, #tpu.memory_space<vmem>>, vector<1x1x2x8xf32>
    %26 = vector.shape_cast %24 : vector<2x8xf32> to vector<1x1x2x8xf32>
    %27 = arith.addf %25, %26 : vector<1x1x2x8xf32>
    %c0_12 = arith.constant 0 : index
    %c0_13 = arith.constant 0 : index
    %c0_14 = arith.constant 0 : index
    %c0_15 = arith.constant 0 : index
    %28 = vector.load %arg6[%c0_12, %c0_13, %c0_14, %c0_15] : memref<1x1x2x8xf32, #tpu.memory_space<vmem>>, vector<1x1x2x8xf32>
    tpu.vector_store %arg6[%c0_12, %c0_13, %c0_14, %c0_15], %27 {strides = array<i32>} : memref<1x1x2x8xf32, #tpu.memory_space<vmem>>, vector<1x1x2x8xf32>,
    return
  }
  func.func @transform_0(%arg0: i32, %arg1: i32, %arg2: i32, %arg3: i32) -> (i32, i32, i32) {
    %c1_i32 = arith.constant 1 : i32
    %0 = arith.muli %arg2, %c1_i32 : i32
    %1 = arith.addi %0, %arg3 : i32
    %c0_i32 = arith.constant 0 : i32
    %c0_i32_0 = arith.constant 0 : i32
    return %arg0, %c0_i32, %1 : i32, i32, i32
  }
  func.func @transform_1(%arg0: i32, %arg1: i32, %arg2: i32, %arg3: i32) -> (i32, i32) {
    %c0_i32 = arith.constant 0 : i32
    %c0_i32_0 = arith.constant 0 : i32
    return %arg1, %c0_i32 : i32, i32
  }
  func.func @transform_2(%arg0: i32, %arg1: i32, %arg2: i32, %arg3: i32) -> (i32, i32, i32, i32) {
    %c0_i32 = arith.constant 0 : i32
    %c0_i32_0 = arith.constant 0 : i32
    return %arg0, %arg2, %c0_i32, %arg1 : i32, i32, i32, i32
  }
}

</mosaic_0001>

<llo_original>
// kernel: tpu_custom_call.1
$region0: #{tpu_custom_call.1}
  #allocation0 [shape = 'u32[]', space=smem, size = 0x4, offset = 0x4, fixed_abs, tag = 'smem constant byte address 0x4 - core index']
  #allocation1 [shape = 'u32[144,128]{1,0:T(1,128)}', space=vmem, size = 0x12000, scoped, tag = 'internal scratch']
  %s0 = inlined_call_operand.vmem [shape: bf16[2,12,128], index: 0, kind: input, shape index: {}]
  %s1 = inlined_call_operand.vmem [shape: bf16[8,12], index: 1, kind: input, shape index: {}]
  %s2 = inlined_call_operand.hbm [shape: f32[2,1,2,8], index: 2, kind: output, shape index: {}]
  %s3 = sld [smem:[#allocation0]]
  $region45: #{tpu_custom_call.1} parent=0
    _
  %s5 = ssub.s32 1, %s3
  %s6 = scalar_select 0, %s5, %s3
  $region1: #{tpu_custom_call.1} parent=0
    #allocation2 [shape = 'u8[2048]{0}', space=vmem, size = 0x800, scoped, tag = 'output window, operand 0']
    #allocation3 [shape = 's32[2]{0}', space=sflag, size = 0x8, scoped, tag = 'scoped memory for tpu_custom_call.1']
    %7 = vsyncpa [#allocation3], 0
    %s8 = scalar_lea.sflag [#allocation3], 1
    %9 = vsyncpa %s8, 0
    loop: start=0, step=1, limit=4
    $region2: #{tpu_custom_call.1} parent=1 // loop_pre_header
      _
    $region3: #{tpu_custom_call.1} parent=1 // loop_header
      %s11 = sphi 0, %s15
      %p12 = scmp.ge.s32.totalorder %s11, 4
      %s18 = sphi 0, %s44
      %s19 = sphi 0, %s40
      %s20 = sphi 0, %s36
      %s21 = sphi 0, %s32
      %s22 = sphi 0, %s18
      %s23 = sphi 0, %s19
      %s24 = sphi 0, %s20
      %s25 = sphi 0, %s21
      %s26 = sphi 0, %s22
      %s27 = sphi 0, %s23
      %s28 = sphi 0, %s24
      %s29 = sphi 0, %s25
      %s51 = sphi 0, %s53
      %s54 = sphi 0, %s51
      %s55 = sphi 0, %s54
      %s71 = sphi 0, %s55
      %s77 = sphi 0, %s79
      %s80 = sphi 0, %s77
      %s81 = sphi 0, %s80
      %s97 = sphi 0, %s81
      %s107 = sphi 0, %s109
      %s110 = sphi 0, %s107
      %s111 = sphi 0, %s110
      %s127 = sphi 0, %s111
    $region4: #{tpu_custom_call.1} parent=1 // loop_header_branch
      %14 = sbr.rel (%p12) target = $region8
    $region5: #{tpu_custom_call.1} parent=1 // loop_body
      %s16 = ssub.s32 %s11, 1
      %s17 = ssub.s32 %s11, 2
      %s30 = sadd.s32 1, %s21
      %p31 = scmp.ge.s32.totalorder %s30, 1
      %s32 = scalar_select %p31, 0, %s30
      %s33 = sadd.s32 1, %s20
      %s34 = scalar_select %p31, %s33, %s20
      %p35 = scmp.ge.s32.totalorder %s34, 1
      %s36 = scalar_select %p35, 0, %s34
      %s37 = sadd.s32 1, %s19
      %s38 = scalar_select %p35, %s37, %s19
      %p39 = scmp.ge.s32.totalorder %s38, 1
      %s40 = scalar_select %p39, 0, %s38
      %s41 = sadd.s32 1, %s18
      %s42 = scalar_select %p39, %s41, %s18
      %p43 = scmp.ge.s32.totalorder %s42, 2
      %s44 = scalar_select %p43, 0, %s42
      %s45 = sadd.s32 %s20, %s21
      %s46 = sadd.s32 %s36, %s32
      %s47 = ssub.s32 %s18, %s44
      %s48 = ssub.s32 %s45, %s46
      %s49 = sor.u32 %s47, %s48
      %p50 = scmp.eq.s32.totalorder %s49, 0
      %s52 = sadd.s32 %s51, 1
      %s53 = scalar_select %p50, %s51, %s52
      %p56 = pneg %p50
      %p57 = scmp.eq.s32.totalorder %s11, 1
      %p58 = por %p56, %p57
      %p59 = scmp.ne.s32.totalorder %s51, %s54
      %p60 = scmp.eq.s32.totalorder %s11, 0
      %p61 = por %p59, %p60
      %p62 = scmp.ne.s32.totalorder %s51, %s54
      %p63 = scmp.eq.s32.totalorder %s16, 1
      %p64 = por %p62, %p63
      %p65 = scmp.ne.s32.totalorder %s54, %s55
      %p66 = scmp.eq.s32.totalorder %s16, 0
      %p67 = por %p65, %p66
      %p68 = scmp.ne.s32.totalorder %s54, %s55
      %p69 = scmp.eq.s32.totalorder %s17, 1
      %p70 = por %p68, %p69
      %p72 = scmp.ne.s32.totalorder %s55, %s71
      %p73 = scmp.eq.s32.totalorder %s17, 0
      %p74 = por %p72, %p73
      %s75 = ssub.s32 %s19, %s40
      %p76 = scmp.eq.s32.totalorder %s75, 0
      %s78 = sadd.s32 %s77, 1
      %s79 = scalar_select %p76, %s77, %s78
      %p82 = pneg %p76
      %p83 = scmp.eq.s32.totalorder %s11, 1
      %p84 = por %p82, %p83
      %p85 = scmp.ne.s32.totalorder %s77, %s80
      %p86 = scmp.eq.s32.totalorder %s11, 0
      %p87 = por %p85, %p86
      %p88 = scmp.ne.s32.totalorder %s77, %s80
      %p89 = scmp.eq.s32.totalorder %s16, 1
      %p90 = por %p88, %p89
      %p91 = scmp.ne.s32.totalorder %s80, %s81
      %p92 = scmp.eq.s32.totalorder %s16, 0
      %p93 = por %p91, %p92
      %p94 = scmp.ne.s32.totalorder %s80, %s81
      %p95 = scmp.eq.s32.totalorder %s17, 1
      %p96 = por %p94, %p95
      %p98 = scmp.ne.s32.totalorder %s81, %s97
      %p99 = scmp.eq.s32.totalorder %s17, 0
      %p100 = por %p98, %p99
      %s101 = ssub.s32 %s18, %s44
      %s102 = ssub.s32 %s20, %s36
      %s103 = sor.u32 %s101, %s102
      %s104 = ssub.s32 %s19, %s40
      %s105 = sor.u32 %s103, %s104
      %p106 = scmp.eq.s32.totalorder %s105, 0
      %s108 = sadd.s32 %s107, 1
      %s109 = scalar_select %p106, %s107, %s108
      %p112 = pneg %p106
      %p113 = scmp.eq.s32.totalorder %s11, 1
      %p114 = por %p112, %p113
      %p115 = scmp.ne.s32.totalorder %s107, %s110
      %p116 = scmp.eq.s32.totalorder %s11, 0
      %p117 = por %p115, %p116
      %p118 = scmp.ne.s32.totalorder %s107, %s110
      %p119 = scmp.eq.s32.totalorder %s16, 1
      %p120 = por %p118, %p119
      %p121 = scmp.ne.s32.totalorder %s110, %s111
      %p122 = scmp.eq.s32.totalorder %s16, 0
      %p123 = por %p121, %p122
      %p124 = scmp.ne.s32.totalorder %s110, %s111
      %p125 = scmp.eq.s32.totalorder %s17, 1
      %p126 = por %p124, %p125
      %p128 = scmp.ne.s32.totalorder %s111, %s127
      %p129 = scmp.eq.s32.totalorder %s17, 0
      %p130 = por %p128, %p129
      %p131 = scmp.le.s32.totalorder 1, %s11
      %p132 = scmp.lt.s32.totalorder %s11, 3
      %p133 = pnand %p131, %p132
      %p134 = pneg %p133
      // Predicated region
      $region9: #{tpu_custom_call.1} parent=5 // pred_check
        _
      $region10: #{tpu_custom_call.1} parent=5 // pred_check_branch
        %136 = sbr.rel (%p133) target = $region12
      $region11: #{tpu_custom_call.1} parent=5 // pred_region
        %s137 = ssub.s32 %s11, 1
        // Predicated region
        $region13: #{tpu_custom_call.1} parent=11 // pred_check
          %p138 = pneg %p93
        $region14: #{tpu_custom_call.1} parent=11 // pred_check_branch
          %140 = sbr.rel (%p138) target = $region16
        $region15: #{tpu_custom_call.1} parent=11 // pred_region
          %p141 = scmp.lt.s32.totalorder %s23, 0
          %s142 = scalar_select %p141, %s23, 0
          %s143 = smul.addr %s142, 4
          %s144 = scalar_lea.vmem %s1, %s143
        $region16: #{tpu_custom_call.1} parent=11 // pred_fallthru
          _
      $region12: #{tpu_custom_call.1} parent=5 // pred_fallthru
        _
      %p145 = scmp.lt.s32.totalorder %s11, 2
      // Predicated region
      $region17: #{tpu_custom_call.1} parent=5 // pred_check
        %p146 = pneg %p145
      $region18: #{tpu_custom_call.1} parent=5 // pred_check_branch
        %148 = sbr.rel (%p146) target = $region20
      $region19: #{tpu_custom_call.1} parent=5 // pred_region
        // Predicated region
        $region21: #{tpu_custom_call.1} parent=19 // pred_check
          %p149 = pneg %p61
        $region22: #{tpu_custom_call.1} parent=19 // pred_check_branch
          %151 = sbr.rel (%p149) target = $region24
        $region23: #{tpu_custom_call.1} parent=19 // pred_region
          %s152 = sadd.s32 %s20, %s21
          %p153 = scmp.lt.s32.totalorder %s18, 1
          %s154 = scalar_select %p153, %s18, 1
          %p155 = scmp.lt.s32.totalorder %s152, 0
          %s156 = scalar_select %p155, %s152, 0
          %s157 = smul.addr %s154, 2
          %s158 = sadd.s32 %s156, %s157
          %s159 = smul.addr %s158, 4
          %s160 = scalar_lea.vmem %s0, %s159
          %s161 = sadd.s32 %s20, %s21
        $region24: #{tpu_custom_call.1} parent=19 // pred_fallthru
          _
      $region20: #{tpu_custom_call.1} parent=5 // pred_fallthru
        _
      %p162 = scmp.le.s32.totalorder 1, %s11
      %p163 = scmp.lt.s32.totalorder %s11, 3
      %p164 = pnand %p162, %p163
      %p165 = pneg %p164
      // Predicated region
      $region25: #{tpu_custom_call.1} parent=5 // pred_check
        _
      $region26: #{tpu_custom_call.1} parent=5 // pred_check_branch
        %167 = sbr.rel (%p164) target = $region28
      $region27: #{tpu_custom_call.1} parent=5 // pred_region
        %s168 = ssub.s32 %s11, 1
        %s169 = sadd.s32 %s24, %s25
        %p170 = scmp.lt.s32.totalorder %s22, 1
        %s171 = scalar_select %p170, %s22, 1
        %p172 = scmp.lt.s32.totalorder %s169, 0
        %s173 = scalar_select %p172, %s169, 0
        %s174 = smul.addr %s171, 2
        %s175 = sadd.s32 %s173, %s174
        %s176 = smul.addr %s175, 4
        %s177 = scalar_lea.vmem %s0, %s176
        %p178 = pneg %p67
        %p179 = pneg %p64
        %p180 = scmp.lt.s32.totalorder %s23, 0
        %s181 = scalar_select %p180, %s23, 0
        %s182 = smul.addr %s181, 4
        %s183 = scalar_lea.vmem %s1, %s182
        %p184 = pneg %p93
        %p185 = pneg %p90
        %p186 = pneg %p123
        %p187 = pneg %p120
        %s188 = sand.u32 %s110, 1
        %s189 = scalar_lea.sflag [#allocation3], %s188
        %s190 = sand.u32 %s110, 1
        %s191 = smul.addr %s190, 2
        %s192 = scalar_lea.vmem [#allocation2], %s191
        %s193 = sadd.s32 %s24, %s25
        %p194 = scmp.lt.s32.totalorder %s22, 1
        %s195 = scalar_select %p194, %s22, 1
        %p196 = scmp.lt.s32.totalorder %s193, 0
        %s197 = scalar_select %p196, %s193, 0
        %s198 = smul.addr %s195, 2
        %s199 = sadd.s32 %s197, %s198
        %s200 = smul.addr %s199, 4
        %s201 = scalar_lea.vmem %s0, %s200
        %s202 = sadd.s32 %s24, %s25
        %p203 = scmp.lt.s32.totalorder %s23, 0
        %s204 = scalar_select %p203, %s23, 0
        %s205 = smul.addr %s204, 4
        %s206 = scalar_lea.vmem %s1, %s205
        %p208 = scmp.eq.s32.totalorder %s25, 0
        // Predicated region
        $region29: #{tpu_custom_call.1} parent=27 // pred_check
          %p209 = pneg %p208
        $region30: #{tpu_custom_call.1} parent=27 // pred_check_branch
          %211 = sbr.rel (%p209) target = $region32
        $region31: #{tpu_custom_call.1} parent=27 // pred_region
          %vm212 = vcmask 58368
          %213 = vst.msk [vmem:[%s192] sm:$0x3] %vm212, 0.0
        $region32: #{tpu_custom_call.1} parent=27 // pred_fallthru
          _
        %v214 = vld [vmem:[%s206] sm:$0xf]
        %v215 = vld [vmem:[%s201] sm:$0xf]
        %v216 = vld [vmem:[%s201 + $0x4] sm:$0x3]
        %v219 = vunpack.c.l.b16 %v215
        %v220 = vunpack.c.l.b16 %v216
        %v221 = vpack.c.b16 %v220, %v219
        %vm222 = vcmask 97280
        %v224 = vsel %vm222, %v214, 0
        %vm226 = vcmask 1045504
        %v228 = vsel %vm226, %v221, 0
        %230 = vmatprep.subr.bf16.mxu0 0
        %231 = vmatpush1.bf16.msra.mxu0 %v228
        %232 = vmatprep.subr.bf16.mxu0 0
        %233 = vmatpush1.bf16.msra.mxu0 0
        %234 = vmatprep.subr.bf16.mxu0 0
        %235 = vmatpush1.bf16.msra.mxu0 0
        %236 = vmatprep.subr.bf16.mxu0 0
        %237 = vmatpush1.bf16.msra.mxu0 0
        %238 = vmatprep.subr.bf16.mxu0 0
        %239 = vmatpush1.bf16.msra.mxu0 0
        %240 = vmatprep.subr.bf16.mxu0 0
        %241 = vmatpush1.bf16.msra.mxu0 0
        %242 = vmatprep.subr.bf16.mxu0 0
        %243 = vmatpush1.bf16.msra.mxu0 0
        %244 = vmatprep.subr.bf16.mxu0 0
        %245 = vmatpush1.bf16.msra.mxu0 0
        %246 = vmatprep.subr.bf16.mxu0 0
        %247 = vmatpush1.bf16.msra.mxu0 0
        %248 = vmatprep.subr.bf16.mxu0 0
        %249 = vmatpush1.bf16.msra.mxu0 0
        %250 = vmatprep.subr.bf16.mxu0 0
        %251 = vmatpush1.bf16.msra.mxu0 0
        %252 = vmatprep.subr.bf16.mxu0 0
        %253 = vmatpush1.bf16.msra.mxu0 0
        %254 = vmatprep.subr.bf16.mxu0 0
        %255 = vmatpush1.bf16.msra.mxu0 0
        %256 = vmatprep.subr.bf16.mxu0 0
        %257 = vmatpush1.bf16.msra.mxu0 0
        %258 = vmatprep.subr.bf16.mxu0 0
        %259 = vmatpush1.bf16.msra.mxu0 0
        %260 = vmatprep.subr.bf16.mxu0 0
        %261 = vmatpush1.bf16.msra.mxu0 0
        %262 = vmatprep.mubr.bf16.mxu0 0
        %263 = vmatmul.mubr.bf16.gmra.mrb[0].mxu0 %v224
        %v264 = vpop.f32.mrb[0].mxu0
        %v265 = vadd.f32 0.0, %v264
        %v266 = vpop.f32.mrb[0].mxu0
        %v267 = vpop.f32.mrb[0].mxu0
        %v268 = vpop.f32.mrb[0].mxu0
        %269 = vdwg.mxu0
        %s270 = sadd.s32 %s24, %s25
        %s271 = smul.u32 %s270, 128
        %v272 = vlaneseq
        %v273 = vand.u32 %v272, 127
        %v274 = vstv %s271
        %v275 = vadd.s32 %v274, %v273
        %vm276 = vcmp.lt.s32.totalorder %v275, 20
        %v277 = vsel %vm276, 1, 0
        %vm278 = vcmp.eq.s32.totalorder %v277, 1
        %v279 = vsel %vm278, %v265, 0.0
        %280 = vadd.xlane.f32.xlu0 %v279
        %v281 = vpop.xlane.xlu0 %280
        %v282 = vmul.f32 %v279, %v265
        %283 = vadd.xlane.f32.xlu0 %v282
        %v284 = vpop.xlane.xlu0 %283
        %v286 = vlaneseq
        %v287 = vshrl.u32 %v286, 7
        %v288 = vsub.s32 %v273, %v287
        %v289 = vrot.slane %v281, %v288
        %v292 = vlaneseq
        %v293 = vshrl.u32 %v292, 7
        %v294 = vsub.s32 %v273, %v293
        %v295 = vrot.slane %v284, %v294
        %vm297 = vcmask 1040384
        %v298 = vsel %vm297, %v289, %v295
        %v299 = vld [vmem:[%s192] sm:$0x3]
        %v300 = vadd.f32 %v299, %v298
        %vm301 = vcmask 58368
        %302 = vst.msk [vmem:[%s192] sm:$0x3] %vm301, %v300
        %s303 = sand.u32 %s110, 1
        %s304 = scalar_lea.sflag [#allocation3], %s303
        %s305 = sand.u32 %s110, 1
        %s306 = smul.addr %s305, 2
        %s307 = scalar_lea.vmem [#allocation2], %s306
        // Predicated region
        $region33: #{tpu_custom_call.1} parent=27 // pred_check
          %p308 = pneg %p120
        $region34: #{tpu_custom_call.1} parent=27 // pred_check_branch
          %310 = sbr.rel (%p308) target = $region36
        $region35: #{tpu_custom_call.1} parent=27 // pred_region
          %s312 = ssub.s32 32, 32
          %313 = vsyncadd %s304, %s312
          %s314 = sadd.s32 %s23, %s24
          %s315 = sadd.s32 %s314, %s22
          %s316 = smul.addr %s315, 32
          %s317 = scalar_lea.hbm %s2, %s316
          %s319 = sshll.u32 %s307, 4
          %s320 = int_to_ptr.vmem [resolvable:$true] %s319
          %322 = dma.vmem_to_hbm [thread:$0]  %s320, 32, %s317, %s304
        $region36: #{tpu_custom_call.1} parent=27 // pred_fallthru
          _
      $region28: #{tpu_custom_call.1} parent=5 // pred_fallthru
        _
      %p323 = scmp.le.s32.totalorder 2, %s11
      // Predicated region
      $region37: #{tpu_custom_call.1} parent=5 // pred_check
        %p324 = pneg %p323
      $region38: #{tpu_custom_call.1} parent=5 // pred_check_branch
        %326 = sbr.rel (%p324) target = $region40
      $region39: #{tpu_custom_call.1} parent=5 // pred_region
        %s327 = ssub.s32 %s11, 2
        // Predicated region
        $region41: #{tpu_custom_call.1} parent=39 // pred_check
          %p328 = pneg %p126
        $region42: #{tpu_custom_call.1} parent=39 // pred_check_branch
          %330 = sbr.rel (%p328) target = $region44
        $region43: #{tpu_custom_call.1} parent=39 // pred_region
          %s331 = sand.u32 %s111, 1
          %s332 = scalar_lea.sflag [#allocation3], %s331
          %s333 = sand.u32 %s111, 1
          %s334 = smul.addr %s333, 2
          %s335 = scalar_lea.vmem [#allocation2], %s334
          %336 = dma.done %s332, 32
        $region44: #{tpu_custom_call.1} parent=39 // pred_fallthru
          _
      $region40: #{tpu_custom_call.1} parent=5 // pred_fallthru
        _
    $region6: #{tpu_custom_call.1} parent=1 // loop_footer
      %s15 = sadd.s32 1, %s11
    $region7: #{tpu_custom_call.1} parent=1 // loop_footer_branch
      %10 = sbr.rel target = $region3
    $region8: #{tpu_custom_call.1} parent=1 // loop_exit
      _
    %337 = vsyncpa [#allocation3], 1
    %s338 = scalar_lea.sflag [#allocation3], 1
    %339 = vsyncpa %s338, 1

</llo_original>
